<compile_context>
chip_gen: v5e
topology: v5e:2x2
jax: 0.10.0
libtpu: 0.0.40
codegen_flags: <defaults>
</compile_context>

<pallas_src>
import jax
import jax.numpy as jnp
from jax.experimental import pallas as pl
from jax.experimental.pallas import tpu as pltpu


def _scale_kernel(a_ref, x_ref, o_ref):
    # a_ref: (1,) scalar operand resident in SMEM for the whole call.
    # Cast the scalar once so the elementwise multiply stays in x's dtype
    # (keeps bf16 math packed; output dtype matches o_ref exactly).
    o_ref[...] = a_ref[0].astype(x_ref.dtype) * x_ref[...]


_LANE_CANDIDATES = (1024, 512, 256, 128)
_MIN_PALLAS_BYTES = 256 * 1024   # below this, pallas_call dispatch overhead dominates
_MIN_SPLIT_BYTES = 1024 * 1024   # above this, split into >=2 steps for v7x megacore


def _device_tuning():
    """Generation-aware (block_bytes, vmem_limit_bytes)."""
    kind = ""
    try:
        kind = jax.devices()[0].device_kind.lower()
    except Exception:
        pass
    if "v5 lite" in kind or "v5lite" in kind or "v5e" in kind:
        # v5e: 16 MiB scoped-VMEM default -> ~3 MiB blocks (~12 MiB dbl-buffered).
        return 3 * 1024 * 1024, 14 * 1024 * 1024
    # v6e / v7x (and default): 32 MiB scoped default (64 MiB physical on v7x)
    # -> ~6 MiB blocks (~24 MiB double-buffered in+out), limit set to 28 MiB.
    return 6 * 1024 * 1024, 28 * 1024 * 1024


def _choose_tiling(rows, lane, itemsize, block_bytes):
    """Pick (tile_rows, num_grid_steps) for the (rows, lane) view."""
    sublane = max(8, 32 // itemsize)          # 8 f32, 16 bf16/f16, 32 int8/fp8
    row_bytes = lane * itemsize
    total_bytes = rows * row_bytes
    max_tile_rows = max(sublane, (block_bytes // row_bytes) // sublane * sublane)

    if rows <= max_tile_rows:
        # Whole array fits in one block.
        if total_bytes <= _MIN_SPLIT_BYTES or rows < 2 * sublane:
            # Single full-extent block: minimal overhead, no (8,128) constraint.
            return rows, 1
        # Split into two sublane-aligned steps so both v7x TensorCores (and
        # their DMA engines) get work; a ragged tail block is masked by Pallas.
        tile_rows = (-(-rows // 2) + sublane - 1) // sublane * sublane
        tile_rows = min(tile_rows, rows)
        return tile_rows, pl.cdiv(rows, tile_rows)

    # Long grid: aim for an even number of ~block_bytes steps (balanced split
    # across the two v7x TensorCores, no trailing-step imbalance).
    steps = pl.cdiv(rows, max_tile_rows)
    if steps % 2:
        steps += 1
    tile_rows = (-(-rows // steps) + sublane - 1) // sublane * sublane
    tile_rows = max(sublane, min(tile_rows, max_tile_rows))
    return tile_rows, pl.cdiv(rows, tile_rows)


def generator_forward(a, x, *, force_kernel=False):
    """Compute a * x (a: shape-(1,) scalar parameter, x: arbitrary shape)."""
    orig_shape = x.shape
    n = x.size
    itemsize = jnp.dtype(x.dtype).itemsize
    total_bytes = n * itemsize

    # Widest lane count that divides n -> free reshape, no padding.
    lane = next((c for c in _LANE_CANDIDATES if n % c == 0), None)

    # Ragged or tiny inputs: a plain XLA multiply is one HBM read + one write,
    # strictly cheaper than pad+kernel+slice or the fixed dispatch overhead.
    if lane is None or (total_bytes < _MIN_PALLAS_BYTES and not force_kernel):
        return (a[0].astype(x.dtype) * x).reshape(orig_shape)

    rows = n // lane
    block_bytes, vmem_limit = _device_tuning()
    tile_rows, num_steps = _choose_tiling(rows, lane, itemsize, block_bytes)

    x2d = x.reshape(rows, lane)
    out2d = pl.pallas_call(
        _scale_kernel,
        out_shape=jax.ShapeDtypeStruct((rows, lane), x.dtype),
        grid_spec=pltpu.PrefetchScalarGridSpec(
            num_scalar_prefetch=0,
            grid=(num_steps,),
            in_specs=[
                pl.BlockSpec(memory_space=pltpu.SMEM),              # scalar `a`
                pl.BlockSpec((tile_rows, lane), lambda i: (i, 0)),  # x tile
            ],
            out_specs=pl.BlockSpec((tile_rows, lane), lambda i: (i, 0)),
        ),
        compiler_params=pltpu.CompilerParams(
            dimension_semantics=("parallel",),
            vmem_limit_bytes=vmem_limit,
        ),
        cost_estimate=pl.CostEstimate(
            flops=n, transcendentals=0, bytes_accessed=2 * total_bytes),
    )(a, x2d)

    return out2d.reshape(orig_shape)


if __name__ == "__main__":
    key = jax.random.PRNGKey(0)
    k_a, k_x, k_y = jax.random.split(key, 3)

    # Parameter init mirrors torch.rand(1): uniform [0, 1), float32.
    a = jax.random.uniform(k_a, (1,), dtype=jnp.float32)

    # 1) Canonical small NCHW input (forced through the Pallas kernel:
    #    single full-extent block).
    x = jax.random.normal(k_x, (2, 4, 16, 16), dtype=jnp.float32)
    out = jax.block_until_ready(generator_forward(a, x, force_kernel=True))
    assert out.shape == x.shape and out.dtype == x.dtype
    assert jnp.allclose(out, a[0] * x, atol=1e-6, rtol=1e-6)

    # 1b) Default path for the tiny input (plain-XLA bypass) -- same result.
    out_bypass = jax.block_until_ready(generator_forward(a, x))
    assert jnp.allclose(out_bypass, a[0] * x, atol=1e-6, rtol=1e-6)

    # 2) Larger f32 input (2 MiB): exercises the >=2-step, megacore-splittable grid.
    y = jax.random.normal(k_y, (8, 16, 64, 64), dtype=jnp.float32)
    out_y = jax.block_until_ready(generator_forward(a, y))
    assert jnp.allclose(out_y, a[0] * y, atol=1e-6, rtol=1e-6)

    # 3) bf16 input: math stays in bf16 inside the kernel, output dtype preserved.
    yb = y.astype(jnp.bfloat16)
    out_b = jax.block_until_ready(generator_forward(a, yb))
    ref_b = a[0].astype(jnp.bfloat16) * yb
    assert out_b.dtype == jnp.bfloat16
    assert jnp.allclose(out_b.astype(jnp.float32), ref_b.astype(jnp.float32),
                        atol=1e-2, rtol=1e-2)

    print("KERNEL_OK")
</pallas_src>

<mosaic_0001>
module attributes {stable_mosaic.version = 11 : i64} {
  func.func @_scale_kernel(%arg0: i32, %arg1: memref<1xf32, #tpu.memory_space<smem>>, %arg2: memref<2x1024xf32, #tpu.memory_space<vmem>>, %arg3: memref<2x1024xf32, #tpu.memory_space<vmem>>) attributes {dimension_semantics = [#tpu.dimension_semantics<parallel>], iteration_bounds = array<i64: 1>, scalar_prefetch = 0 : i64, scratch_operands = 0 : i64, tpu.core_type = #tpu.core_type<tc>, window_params = [{transform_indices = @transform_0, window_bounds = array<i64: 1>}, {transform_indices = @transform_1, window_bounds = array<i64: 2, 1024>}, {transform_indices = @transform_2, window_bounds = array<i64: 2, 1024>}]} {
    %c0 = arith.constant 0 : index
    %0 = memref.load %arg1[%c0] : memref<1xf32, #tpu.memory_space<smem>>
    %c0_0 = arith.constant 0 : index
    %c0_1 = arith.constant 0 : index
    %1 = vector.load %arg2[%c0_0, %c0_1] : memref<2x1024xf32, #tpu.memory_space<vmem>>, vector<2x1024xf32>
    %2 = vector.broadcast %0 : f32 to vector<2x1024xf32>
    %3 = arith.mulf %2, %1 : vector<2x1024xf32>
    %c0_2 = arith.constant 0 : index
    %c0_3 = arith.constant 0 : index
    %4 = vector.load %arg3[%c0_2, %c0_3] : memref<2x1024xf32, #tpu.memory_space<vmem>>, vector<2x1024xf32>
    tpu.vector_store %arg3[%c0_2, %c0_3], %3 {strides = array<i32>} : memref<2x1024xf32, #tpu.memory_space<vmem>>, vector<2x1024xf32>,
    return
  }
  func.func @transform_0(%arg0: i32) -> i32 {
    %c0_i32 = arith.constant 0 : i32
    %c0_i32_0 = arith.constant 0 : i32
    return %c0_i32 : i32
  }
  func.func @transform_1(%arg0: i32) -> (i32, i32) {
    %c0_i32 = arith.constant 0 : i32
    %c0_i32_0 = arith.constant 0 : i32
    return %arg0, %c0_i32 : i32, i32
  }
  func.func @transform_2(%arg0: i32) -> (i32, i32) {
    %c0_i32 = arith.constant 0 : i32
    %c0_i32_0 = arith.constant 0 : i32
    return %arg0, %c0_i32 : i32, i32
  }
}

</mosaic_0001>

<llo_original>
// kernel: tpu_custom_call.1
$region0: #{tpu_custom_call.1}
  #allocation0 [shape = 'u32[]', space=smem, size = 0x4, offset = 0x4, fixed_abs, tag = 'smem constant byte address 0x4 - core index']
  #allocation1 [shape = 'u32[72,128]{1,0:T(1,128)}', space=vmem, size = 0x9000, scoped, tag = 'internal scratch']
  #allocation2 [shape = 'f32[1]{0:T(128)S(6)}', space=smem, size = 0x200, scoped, tag = 'scoped memory for tpu_custom_call.1']
  %s0 = inlined_call_operand.<no memory space> [shape: f32[1], index: 0, kind: input, shape index: {}]
  %s1 = inlined_call_operand.hbm [shape: f32[2,1024], index: 1, kind: input, shape index: {}]
  %s2 = inlined_call_operand.hbm [shape: f32[2,1024], index: 2, kind: output, shape index: {}]
  %s3 = sld [smem:[#allocation0]]
  $region22: #{tpu_custom_call.1} parent=0
    _
  %s5 = ssub.s32 1, %s3
  %s6 = scalar_select 0, %s5, %s3
  %7 = sst [smem:[#allocation2]] %s0
  $region1: #{tpu_custom_call.1} parent=0
    #allocation3 [shape = 'u8[8192]{0}', space=vmem, size = 0x2000, scoped, tag = 'input window, operand 1, single buffered']
    #allocation4 [shape = 's32[1]{0}', space=sflag, size = 0x4, scoped, tag = 'scoped memory for tpu_custom_call.1']
    #allocation5 [shape = 's32[1]{0}', space=sflag, size = 0x4, scoped, tag = 'scoped memory for tpu_custom_call.1']
    #allocation6 [shape = 'u8[8192]{0}', space=vmem, size = 0x2000, scoped, tag = 'output window, operand 0, single buffered']
    %8 = vsyncpa [#allocation4], 0
    %9 = vsyncpa [#allocation5], 0
    // Predicated region
    $region2: #{tpu_custom_call.1} parent=1 // pred_check
      _
    $region3: #{tpu_custom_call.1} parent=1 // pred_check_branch
      %11 = sbr.rel (0) target = $region5
    $region4: #{tpu_custom_call.1} parent=1 // pred_region
      _
    $region5: #{tpu_custom_call.1} parent=1 // pred_fallthru
      _
    // Predicated region
    $region6: #{tpu_custom_call.1} parent=1 // pred_check
      _
    $region7: #{tpu_custom_call.1} parent=1 // pred_check_branch
      %13 = sbr.rel (0) target = $region9
    $region8: #{tpu_custom_call.1} parent=1 // pred_region
      %15 = vsyncadd [#allocation4], 0
      %s17 = sshll.u32 %s1, 4
      %s18 = int_to_ptr.hbm [resolvable:$true] %s17
      %s19 = sshll.u32 [#allocation3], 4
      %s20 = int_to_ptr.vmem [resolvable:$true] %s19
      %22 = dma.hbm_to_vmem [thread:$0]  %s18, 256, %s20, [#allocation4]
    $region9: #{tpu_custom_call.1} parent=1 // pred_fallthru
      _
    // Predicated region
    $region10: #{tpu_custom_call.1} parent=1 // pred_check
      _
    $region11: #{tpu_custom_call.1} parent=1 // pred_check_branch
      %24 = sbr.rel (0) target = $region13
    $region12: #{tpu_custom_call.1} parent=1 // pred_region
      %26 = dma.done [#allocation4], 256
    $region13: #{tpu_custom_call.1} parent=1 // pred_fallthru
      _
    %s27 = sld [smem:[#allocation2]]
    %v28 = vld [vmem:[#allocation3] sm:$0xff]
    %v29 = vld [vmem:[#allocation3 + $0x8] sm:$0xff]
    %v30 = vstv %s27
    %v31 = vmul.f32 %v30, %v28
    %v32 = vmul.f32 %v30, %v29
    %33 = vst [vmem:[#allocation6] sm:$0xff] %v31
    %34 = vst [vmem:[#allocation6 + $0x8] sm:$0xff] %v32
    // Predicated region
    $region14: #{tpu_custom_call.1} parent=1 // pred_check
      _
    $region15: #{tpu_custom_call.1} parent=1 // pred_check_branch
      %36 = sbr.rel (0) target = $region17
    $region16: #{tpu_custom_call.1} parent=1 // pred_region
      %38 = vsyncadd [#allocation5], 0
      %s40 = sshll.u32 [#allocation6], 4
      %s41 = int_to_ptr.vmem [resolvable:$true] %s40
      %s42 = sshll.u32 %s2, 4
      %s43 = int_to_ptr.hbm [resolvable:$true] %s42
      %45 = dma.vmem_to_hbm [thread:$0]  %s41, 256, %s43, [#allocation5]
    $region17: #{tpu_custom_call.1} parent=1 // pred_fallthru
      _
    // Predicated region
    $region18: #{tpu_custom_call.1} parent=1 // pred_check
      _
    $region19: #{tpu_custom_call.1} parent=1 // pred_check_branch
      %47 = sbr.rel (0) target = $region21
    $region20: #{tpu_custom_call.1} parent=1 // pred_region
      %49 = dma.done [#allocation5], 256
    $region21: #{tpu_custom_call.1} parent=1 // pred_fallthru
      _
    %50 = vsyncpa [#allocation4], 1
    %51 = vsyncpa [#allocation5], 1

</llo_original>
